<compile_context>
chip_gen: v5e
topology: v5e:2x2
jax: 0.10.0
libtpu: 0.0.40
codegen_flags: <defaults>
</compile_context>

<pallas_src>
import functools

import jax
import jax.numpy as jnp
from jax.experimental import pallas as pl
from jax.experimental.pallas import tpu as pltpu


def _mtce_pos_kernel(logits_ref, out_ref, *, num_items: int, vocab_tile: int):
    """Accumulate sum(max(x,0) + log1p(exp(-|x|))) over one (batch_tile, vocab_tile)
    block into a lane-dense (8, 128) partial-sum tile (one tile per batch block)."""
    v = pl.program_id(1)

    @pl.when(v == 0)
    def _():
        out_ref[...] = jnp.zeros_like(out_ref)

    tb, tv = logits_ref.shape                     # static block shape
    n_lane_groups = tv // 128                     # tv is always a multiple of 128
    n_row_groups = tb // 8                        # tb is always a multiple of 8
    lanes_pad = (num_items % vocab_tile) != 0     # static: vocab tail needs masking?

    if lanes_pad:
        lane_ok = (jax.lax.broadcasted_iota(jnp.int32, (8, tv), 1)
                   + v * vocab_tile) < num_items   # hoisted once per grid step
    else:
        lane_ok = None

    def fold_rows(x8):
        # x8: (8, tv) native dtype -> f32 positive BCE term, lane-folded to (8, 128).
        x = x8.astype(jnp.float32)
        p = jnp.maximum(x, 0.0) + jnp.log1p(jnp.exp(-jnp.abs(x)))
        if lane_ok is not None:
            p = jnp.where(lane_ok, p, 0.0)         # zero padded vocab lanes (NaN-safe)
        s = p[:, 0:128]
        for c in range(1, n_lane_groups):          # static, aligned lane-group adds
            s = s + p[:, c * 128:(c + 1) * 128]
        return s

    def row_body(r, carry):
        start = pl.multiple_of(r * 8, 8)
        return carry + fold_rows(logits_ref[pl.ds(start, 8), :])

    unroll = True if n_row_groups <= 8 else 8
    part = jax.lax.fori_loop(0, n_row_groups, row_body,
                             jnp.zeros((8, 128), jnp.float32), unroll=unroll)

    out_ref[...] += part


def _round_up(x: int, m: int) -> int:
    return ((x + m - 1) // m) * m


def _vmem_capacity_bytes() -> int:
    try:
        info = pltpu.get_tpu_info()
        cap = getattr(info, "vmem_capacity_bytes", None)
        if cap:
            return int(cap)
    except Exception:
        pass
    return 64 * 1024 * 1024   # unknown -> assume the smallest (v7x-safe) budget


def _choose_tiles(bs_pad: int, num_items: int, itemsize: int):
    """Generation-aware (batch_tile, vocab_tile, vmem_limit_bytes)."""
    cap = _vmem_capacity_bytes()
    if cap <= 64 * 1024 * 1024:                    # v7x: 64 MiB VMEM per TensorCore
        block_budget = 8 * 1024 * 1024
        vmem_limit = 32 * 1024 * 1024
        force_two_batch_tiles = True               # feed both TCs via the parallel axis
    else:                                          # v5e / v6e: 128 MiB VMEM
        block_budget = 16 * 1024 * 1024
        vmem_limit = 64 * 1024 * 1024
        force_two_batch_tiles = False

    # Vocab tile: always lane-aligned (multiple of 128), capped at 4096 lanes;
    # cdiv + in-kernel mask handles any tail.
    vocab_tile = min(_round_up(num_items, 128), 4096)

    # Batch tile: multiple of 8 dividing the (padded) batch, as large as the budget allows.
    max_bt = max(8, (block_budget // (vocab_tile * itemsize) // 8) * 8)
    limit_bt = min(bs_pad, max_bt)
    if force_two_batch_tiles and bs_pad >= 16:
        limit_bt = min(limit_bt, max(8, ((bs_pad // 2) // 8) * 8))
    batch_tile = 8
    for cand in range(limit_bt, 7, -8):
        if bs_pad % cand == 0:
            batch_tile = cand
            break
    return batch_tile, vocab_tile, vmem_limit


def multi_target_cross_entropy_loss(target: jax.Array,
                                    logits: jax.Array,
                                    *,
                                    pad_token_id: int = 0,
                                    batch_tile: int | None = None,
                                    vocab_tile: int | None = None) -> jax.Array:
    """target: [BS, K] int item ids, logits: [BS, I] float. Returns scalar mean BCE loss."""
    bs, num_items = logits.shape
    _, k_targets = target.shape
    tgt = target.astype(jnp.int32)

    # ---- wrapper-side "-x*y" correction: gather logits at the unique, non-pad targets.
    # Dedup within each row (scatter/clip-to-1 semantics) and drop pad ids.
    dup_prev = jnp.any(
        (tgt[:, :, None] == tgt[:, None, :])
        & jnp.tril(jnp.ones((k_targets, k_targets), dtype=bool), k=-1),
        axis=-1)
    valid = (tgt != pad_token_id) & jnp.logical_not(dup_prev)
    picked = jnp.take_along_axis(logits, tgt, axis=1).astype(jnp.float32)    # [BS, K]
    correction = jnp.sum(jnp.where(valid, picked, 0.0))

    # ---- pad the batch to a multiple of 8 with -1e30 (its positive BCE term is exactly 0).
    pad_rows = (-bs) % 8
    logits_k = jnp.pad(logits, ((0, pad_rows), (0, 0)), constant_values=-1e30) \
        if pad_rows else logits
    bs_pad = bs + pad_rows

    auto_bt, auto_vt, vmem_limit = _choose_tiles(
        bs_pad, num_items, jnp.dtype(logits.dtype).itemsize)
    batch_tile = batch_tile or auto_bt
    vocab_tile = vocab_tile or auto_vt
    assert batch_tile % 8 == 0 and bs_pad % batch_tile == 0, "bad batch tile"
    assert vocab_tile % 128 == 0, "vocab tile must be lane-aligned"

    n_b = bs_pad // batch_tile
    n_v = pl.cdiv(num_items, vocab_tile)

    kernel = functools.partial(_mtce_pos_kernel,
                               num_items=num_items, vocab_tile=vocab_tile)

    partials = pl.pallas_call(
        kernel,
        out_shape=jax.ShapeDtypeStruct((n_b * 8, 128), jnp.float32),
        grid_spec=pltpu.PrefetchScalarGridSpec(
            num_scalar_prefetch=0,
            grid=(n_b, n_v),
            in_specs=[pl.BlockSpec((batch_tile, vocab_tile), lambda b, v: (b, v))],
            out_specs=pl.BlockSpec((8, 128), lambda b, v: (b, 0)),
        ),
        compiler_params=pltpu.CompilerParams(
            dimension_semantics=("parallel", "arbitrary"),
            vmem_limit_bytes=vmem_limit,
        ),
    )(logits_k)

    total_pos = jnp.sum(partials)
    # Divisor is an exact Python int; single rounding when promoted to f32.
    return (total_pos - correction) / (bs * num_items)


def _reference(target, logits, pad_token_id=0):
    bs, num_items = logits.shape
    one_hots = jax.nn.one_hot(target, num_items, dtype=jnp.float32)   # [BS, K, I]
    multi_hot = jnp.clip(one_hots.sum(axis=1), 0.0, 1.0)              # [BS, I]
    multi_hot = multi_hot.at[:, pad_token_id].set(0.0)
    x = logits.astype(jnp.float32)
    loss = jnp.maximum(x, 0.0) - x * multi_hot + jnp.log1p(jnp.exp(-jnp.abs(x)))
    return jnp.mean(loss)


if __name__ == "__main__":
    PAD = 0
    key = jax.random.PRNGKey(0)
    k_tgt, k_log, k_pad, k_tgt2, k_log2, k_pad2 = jax.random.split(key, 6)

    # --- test 1: aligned shapes, duplicate + pad targets, auto tiling -----------------
    BS, K, I = 16, 4, 512
    target = jax.random.randint(k_tgt, (BS, K), minval=1, maxval=I, dtype=jnp.int32)
    pad_mask = jax.random.bernoulli(k_pad, p=0.3, shape=(BS, K))
    target = jnp.where(pad_mask, PAD, target)
    target = target.at[0, 1].set(target[0, 0])          # force a duplicate target id
    logits = jax.random.normal(k_log, (BS, I), dtype=jnp.float32)

    ref = _reference(target, logits, pad_token_id=PAD)
    loss = jax.block_until_ready(
        multi_target_cross_entropy_loss(target, logits, pad_token_id=PAD))
    assert jnp.allclose(loss, ref, rtol=1e-5, atol=1e-5), (loss, ref)

    # --- test 2: forced multi-tile grid (parallel batch axis + vocab reduction) -------
    loss_tiled = jax.block_until_ready(
        multi_target_cross_entropy_loss(target, logits, pad_token_id=PAD,
                                        batch_tile=8, vocab_tile=128))
    assert jnp.allclose(loss_tiled, ref, rtol=1e-5, atol=1e-5), (loss_tiled, ref)

    # --- test 3: non-aligned shapes (batch not %8, vocab not %128) -> pad + lane mask --
    BS3, K3, I3 = 12, 3, 500
    target3 = jax.random.randint(k_tgt2, (BS3, K3), minval=1, maxval=I3, dtype=jnp.int32)
    pad_mask3 = jax.random.bernoulli(k_pad2, p=0.3, shape=(BS3, K3))
    target3 = jnp.where(pad_mask3, PAD, target3)
    target3 = target3.at[0:4, 2].set(target3[0:4, 1])    # force duplicates
    logits3 = jax.random.normal(k_log2, (BS3, I3), dtype=jnp.float32)

    ref3 = _reference(target3, logits3, pad_token_id=PAD)
    loss3 = jax.block_until_ready(
        multi_target_cross_entropy_loss(target3, logits3, pad_token_id=PAD))
    assert jnp.allclose(loss3, ref3, rtol=1e-5, atol=1e-5), (loss3, ref3)

    loss3_tiled = jax.block_until_ready(
        multi_target_cross_entropy_loss(target3, logits3, pad_token_id=PAD,
                                        batch_tile=8, vocab_tile=128))
    assert jnp.allclose(loss3_tiled, ref3, rtol=1e-5, atol=1e-5), (loss3_tiled, ref3)

    print("KERNEL_OK")
</pallas_src>

<mosaic_0001>
module attributes {stable_mosaic.version = 11 : i64} {
  func.func @_mtce_pos_kernel(%arg0: i32, %arg1: i32, %arg2: memref<8x512xf32, #tpu.memory_space<vmem>>, %arg3: memref<8x128xf32, #tpu.memory_space<vmem>>) attributes {dimension_semantics = [#tpu.dimension_semantics<parallel>, #tpu.dimension_semantics<arbitrary>], iteration_bounds = array<i64: 2, 1>, scalar_prefetch = 0 : i64, scratch_operands = 0 : i64, tpu.core_type = #tpu.core_type<tc>, window_params = [{transform_indices = @transform_0, window_bounds = array<i64: 8, 512>}, {transform_indices = @transform_1, window_bounds = array<i64: 8, 128>}]} {
    %c0_i32 = arith.constant 0 : i32
    %0 = arith.cmpi eq, %arg1, %c0_i32 : i32
    %1 = arith.extui %0 : i1 to i32
    %c0_i32_0 = arith.constant 0 : i32
    %2 = arith.cmpi ne, %1, %c0_i32_0 : i32
    scf.if %2 {
      %cst_8 = arith.constant 0.000000e+00 : f32
      %27 = vector.broadcast %cst_8 : f32 to vector<8x128xf32>
      %c0_9 = arith.constant 0 : index
      %c0_10 = arith.constant 0 : index
      %28 = vector.load %arg3[%c0_9, %c0_10] : memref<8x128xf32, #tpu.memory_space<vmem>>, vector<8x128xf32>
      tpu.vector_store %arg3[%c0_9, %c0_10], %27 {strides = array<i32>} : memref<8x128xf32, #tpu.memory_space<vmem>>, vector<8x128xf32>,
    } else {
    }
    %cst = arith.constant 0.000000e+00 : f32
    %3 = vector.broadcast %cst : f32 to vector<8x128xf32>
    %c0_i32_1 = arith.constant 0 : i32
    %c8_i32 = arith.constant 8 : i32
    %4 = arith.muli %c0_i32_1, %c8_i32 : i32
    %5 = tpu.assume_multiple %4, 8 : i32
    %6 = arith.index_cast %5 : i32 to index
    %c0 = arith.constant 0 : index
    %7 = vector.load %arg2[%6, %c0] : memref<8x512xf32, #tpu.memory_space<vmem>>, vector<8x512xf32>
    %cst_2 = arith.constant 0.000000e+00 : f32
    %8 = vector.broadcast %cst_2 : f32 to vector<8x512xf32>
    %9 = arith.maximumf %7, %8 : vector<8x512xf32>
    %10 = math.absf %7 : vector<8x512xf32>
    %cst_3 = arith.constant 0.000000e+00 : f32
    %11 = vector.broadcast %cst_3 : f32 to vector<8x512xf32>
    %12 = arith.subf %11, %10 : vector<8x512xf32>
    %13 = math.exp %12 : vector<8x512xf32>
    %14 = math.log1p %13 : vector<8x512xf32>
    %15 = arith.addf %9, %14 : vector<8x512xf32>
    %16 = vector.extract_strided_slice %15 {offsets = [0, 0], sizes = [8, 128], strides = [1, 1]} : vector<8x512xf32> to vector<8x128xf32>
    %17 = vector.extract_strided_slice %15 {offsets = [0, 128], sizes = [8, 128], strides = [1, 1]} : vector<8x512xf32> to vector<8x128xf32>
    %18 = arith.addf %16, %17 : vector<8x128xf32>
    %19 = vector.extract_strided_slice %15 {offsets = [0, 256], sizes = [8, 128], strides = [1, 1]} : vector<8x512xf32> to vector<8x128xf32>
    %20 = arith.addf %18, %19 : vector<8x128xf32>
    %21 = vector.extract_strided_slice %15 {offsets = [0, 384], sizes = [8, 128], strides = [1, 1]} : vector<8x512xf32> to vector<8x128xf32>
    %22 = arith.addf %20, %21 : vector<8x128xf32>
    %23 = arith.addf %3, %22 : vector<8x128xf32>
    %c1_i32 = arith.constant 1 : i32
    %c0_4 = arith.constant 0 : index
    %c0_5 = arith.constant 0 : index
    %24 = vector.load %arg3[%c0_4, %c0_5] : memref<8x128xf32, #tpu.memory_space<vmem>>, vector<8x128xf32>
    %25 = arith.addf %24, %23 : vector<8x128xf32>
    %c0_6 = arith.constant 0 : index
    %c0_7 = arith.constant 0 : index
    %26 = vector.load %arg3[%c0_6, %c0_7] : memref<8x128xf32, #tpu.memory_space<vmem>>, vector<8x128xf32>
    tpu.vector_store %arg3[%c0_6, %c0_7], %25 {strides = array<i32>} : memref<8x128xf32, #tpu.memory_space<vmem>>, vector<8x128xf32>,
    return
  }
  func.func @transform_0(%arg0: i32, %arg1: i32) -> (i32, i32) {
    %c0_i32 = arith.constant 0 : i32
    return %arg0, %arg1 : i32, i32
  }
  func.func @transform_1(%arg0: i32, %arg1: i32) -> (i32, i32) {
    %c0_i32 = arith.constant 0 : i32
    %c0_i32_0 = arith.constant 0 : i32
    return %arg0, %c0_i32 : i32, i32
  }
}

</mosaic_0001>

<llo_original>
// kernel: tpu_custom_call.1
$region0: #{tpu_custom_call.1}
  #allocation0 [shape = 'u32[]', space=smem, size = 0x4, offset = 0x4, fixed_abs, tag = 'smem constant byte address 0x4 - core index']
  #allocation1 [shape = 'u32[72,128]{1,0:T(1,128)}', space=vmem, size = 0x9000, scoped, tag = 'internal scratch']
  %s0 = inlined_call_operand.hbm [shape: f32[16,512], index: 0, kind: input, shape index: {}]
  %s1 = inlined_call_operand.hbm [shape: f32[16,128], index: 1, kind: output, shape index: {}]
  %s2 = sld [smem:[#allocation0]]
  $region45: #{tpu_custom_call.1} parent=0
    _
  %s4 = ssub.s32 1, %s2
  %s5 = scalar_select 0, %s4, %s2
  $region1: #{tpu_custom_call.1} parent=0
    #allocation2 [shape = 'u8[32768]{0}', space=vmem, size = 0x8000, scoped, tag = 'input window, operand 0']
    #allocation3 [shape = 's32[2]{0}', space=sflag, size = 0x8, scoped, tag = 'scoped memory for tpu_custom_call.1']
    #allocation4 [shape = 's32[2]{0}', space=sflag, size = 0x8, scoped, tag = 'scoped memory for tpu_custom_call.1']
    #allocation5 [shape = 'u8[8192]{0}', space=vmem, size = 0x2000, scoped, tag = 'output window, operand 0']
    %6 = vsyncpa [#allocation3], 0
    %s7 = scalar_lea.sflag [#allocation3], 1
    %8 = vsyncpa %s7, 0
    %9 = vsyncpa [#allocation4], 0
    %s10 = scalar_lea.sflag [#allocation4], 1
    %11 = vsyncpa %s10, 0
    loop: start=0, step=1, limit=4
    $region2: #{tpu_custom_call.1} parent=1 // loop_pre_header
      _
    $region3: #{tpu_custom_call.1} parent=1 // loop_header
      %s13 = sphi 0, %s17
      %p14 = scmp.ge.s32.totalorder %s13, 4
      %s20 = sphi 0, %s32
      %s21 = sphi 0, %s28
      %s22 = sphi 0, %s20
      %s23 = sphi 0, %s21
      %s24 = sphi 0, %s22
      %s25 = sphi 0, %s23
      %s37 = sphi 0, %s39
      %s40 = sphi 0, %s37
      %s41 = sphi 0, %s40
      %s57 = sphi 0, %s41
      %s63 = sphi 0, %s65
      %s66 = sphi 0, %s63
      %s67 = sphi 0, %s66
      %s83 = sphi 0, %s67
    $region4: #{tpu_custom_call.1} parent=1 // loop_header_branch
      %16 = sbr.rel (%p14) target = $region8
    $region5: #{tpu_custom_call.1} parent=1 // loop_body
      %s18 = ssub.s32 %s13, 1
      %s19 = ssub.s32 %s13, 2
      %s26 = sadd.s32 1, %s21
      %p27 = scmp.ge.s32.totalorder %s26, 1
      %s28 = scalar_select %p27, 0, %s26
      %s29 = sadd.s32 1, %s20
      %s30 = scalar_select %p27, %s29, %s20
      %p31 = scmp.ge.s32.totalorder %s30, 2
      %s32 = scalar_select %p31, 0, %s30
      %s33 = ssub.s32 %s20, %s32
      %s34 = ssub.s32 %s21, %s28
      %s35 = sor.u32 %s33, %s34
      %p36 = scmp.eq.s32.totalorder %s35, 0
      %s38 = sadd.s32 %s37, 1
      %s39 = scalar_select %p36, %s37, %s38
      %p42 = pneg %p36
      %p43 = scmp.eq.s32.totalorder %s13, 1
      %p44 = por %p42, %p43
      %p45 = scmp.ne.s32.totalorder %s37, %s40
      %p46 = scmp.eq.s32.totalorder %s13, 0
      %p47 = por %p45, %p46
      %p48 = scmp.ne.s32.totalorder %s37, %s40
      %p49 = scmp.eq.s32.totalorder %s18, 1
      %p50 = por %p48, %p49
      %p51 = scmp.ne.s32.totalorder %s40, %s41
      %p52 = scmp.eq.s32.totalorder %s18, 0
      %p53 = por %p51, %p52
      %p54 = scmp.ne.s32.totalorder %s40, %s41
      %p55 = scmp.eq.s32.totalorder %s19, 1
      %p56 = por %p54, %p55
      %p58 = scmp.ne.s32.totalorder %s41, %s57
      %p59 = scmp.eq.s32.totalorder %s19, 0
      %p60 = por %p58, %p59
      %s61 = ssub.s32 %s20, %s32
      %p62 = scmp.eq.s32.totalorder %s61, 0
      %s64 = sadd.s32 %s63, 1
      %s65 = scalar_select %p62, %s63, %s64
      %p68 = pneg %p62
      %p69 = scmp.eq.s32.totalorder %s13, 1
      %p70 = por %p68, %p69
      %p71 = scmp.ne.s32.totalorder %s63, %s66
      %p72 = scmp.eq.s32.totalorder %s13, 0
      %p73 = por %p71, %p72
      %p74 = scmp.ne.s32.totalorder %s63, %s66
      %p75 = scmp.eq.s32.totalorder %s18, 1
      %p76 = por %p74, %p75
      %p77 = scmp.ne.s32.totalorder %s66, %s67
      %p78 = scmp.eq.s32.totalorder %s18, 0
      %p79 = por %p77, %p78
      %p80 = scmp.ne.s32.totalorder %s66, %s67
      %p81 = scmp.eq.s32.totalorder %s19, 1
      %p82 = por %p80, %p81
      %p84 = scmp.ne.s32.totalorder %s67, %s83
      %p85 = scmp.eq.s32.totalorder %s19, 0
      %p86 = por %p84, %p85
      %p87 = scmp.le.s32.totalorder 1, %s13
      %p88 = scmp.lt.s32.totalorder %s13, 3
      %p89 = pnand %p87, %p88
      %p90 = pneg %p89
      // Predicated region
      $region9: #{tpu_custom_call.1} parent=5 // pred_check
        _
      $region10: #{tpu_custom_call.1} parent=5 // pred_check_branch
        %92 = sbr.rel (%p89) target = $region12
      $region11: #{tpu_custom_call.1} parent=5 // pred_region
        %s93 = ssub.s32 %s13, 1
      $region12: #{tpu_custom_call.1} parent=5 // pred_fallthru
        _
      %p94 = scmp.lt.s32.totalorder %s13, 2
      // Predicated region
      $region13: #{tpu_custom_call.1} parent=5 // pred_check
        %p95 = pneg %p94
      $region14: #{tpu_custom_call.1} parent=5 // pred_check_branch
        %97 = sbr.rel (%p95) target = $region16
      $region15: #{tpu_custom_call.1} parent=5 // pred_region
        // Predicated region
        $region17: #{tpu_custom_call.1} parent=15 // pred_check
          %p98 = pneg %p47
        $region18: #{tpu_custom_call.1} parent=15 // pred_check_branch
          %100 = sbr.rel (%p98) target = $region20
        $region19: #{tpu_custom_call.1} parent=15 // pred_region
          %s101 = sand.u32 %s37, 1
          %s102 = scalar_lea.sflag [#allocation3], %s101
          %s103 = sand.u32 %s37, 1
          %s104 = smul.addr %s103, 32
          %s105 = scalar_lea.vmem [#allocation2], %s104
          %s106 = smul.u32 4, %s21
          %108 = vsyncadd %s102, 0
          %s109 = smul.addr %s20, 4
          %s110 = sadd.s32 %s106, %s109
          %s111 = smul.addr %s110, 8
          %s112 = scalar_lea.hbm %s0, %s111
          %s114 = sshll.u32 %s112, 4
          %s115 = int_to_ptr.hbm [resolvable:$true] %s114
          %s116 = sshll.u32 %s105, 4
          %s117 = int_to_ptr.vmem [resolvable:$true] %s116
          %119 = dma.hbm_to_vmem [thread:$0]  %s115, 512, %s117, %s102
        $region20: #{tpu_custom_call.1} parent=15 // pred_fallthru
          _
      $region16: #{tpu_custom_call.1} parent=5 // pred_fallthru
        _
      %p120 = scmp.le.s32.totalorder 1, %s13
      %p121 = scmp.lt.s32.totalorder %s13, 3
      %p122 = pnand %p120, %p121
      %p123 = pneg %p122
      // Predicated region
      $region21: #{tpu_custom_call.1} parent=5 // pred_check
        _
      $region22: #{tpu_custom_call.1} parent=5 // pred_check_branch
        %125 = sbr.rel (%p122) target = $region24
      $region23: #{tpu_custom_call.1} parent=5 // pred_region
        %s126 = ssub.s32 %s13, 1
        %s127 = sand.u32 %s40, 1
        %s128 = scalar_lea.sflag [#allocation3], %s127
        %s129 = sand.u32 %s40, 1
        %s130 = smul.addr %s129, 32
        %s131 = scalar_lea.vmem [#allocation2], %s130
        // Predicated region
        $region25: #{tpu_custom_call.1} parent=23 // pred_check
          %p132 = pneg %p53
        $region26: #{tpu_custom_call.1} parent=23 // pred_check_branch
          %134 = sbr.rel (%p132) target = $region28
        $region27: #{tpu_custom_call.1} parent=23 // pred_region
          %136 = dma.done %s128, 512
        $region28: #{tpu_custom_call.1} parent=23 // pred_fallthru
          _
        %s137 = sand.u32 %s40, 1
        %s138 = scalar_lea.sflag [#allocation3], %s137
        %s139 = sand.u32 %s40, 1
        %s140 = smul.addr %s139, 32
        %s141 = scalar_lea.vmem [#allocation2], %s140
        %p142 = pneg %p53
        %p143 = pneg %p50
        %p144 = pneg %p79
        %p145 = pneg %p76
        %s146 = sand.u32 %s66, 1
        %s147 = scalar_lea.sflag [#allocation4], %s146
        %s148 = sand.u32 %s66, 1
        %s149 = smul.addr %s148, 8
        %s150 = scalar_lea.vmem [#allocation5], %s149
        %s151 = smul.u32 4, %s23
        %p152 = scmp.eq.s32.totalorder %s23, 0
        // Predicated region
        $region29: #{tpu_custom_call.1} parent=23 // pred_check
          %p153 = pneg %p152
        $region30: #{tpu_custom_call.1} parent=23 // pred_check_branch
          %155 = sbr.rel (%p153) target = $region32
        $region31: #{tpu_custom_call.1} parent=23 // pred_region
          %156 = vst [vmem:[%s150] sm:$0xff] 0.0
        $region32: #{tpu_custom_call.1} parent=23 // pred_fallthru
          _
        %s157 = smul.u32 0, 4
        %s158 = smul.addr %s157, 8
        %s159 = scalar_lea.vmem %s131, %s158 [#allocation2]
        %v160 = vld [vmem:[%s159] sm:$0xff]
        %v161 = vld [vmem:[%s159 + $0x8] sm:$0xff]
        %v162 = vld [vmem:[%s159 + $0x10] sm:$0xff]
        %v163 = vld [vmem:[%s159 + $0x18] sm:$0xff]
        %v164 = vmax.f32 %v160, 0.0
        %v165 = vmax.f32 %v161, 0.0
        %v166 = vmax.f32 %v162, 0.0
        %v167 = vmax.f32 %v163, 0.0
        %v168 = vand.u32 2147483647, %v160
        %v169 = vand.u32 2147483647, %v161
        %v170 = vand.u32 2147483647, %v162
        %v171 = vand.u32 2147483647, %v163
        %v172 = vsub.f32 0.0, %v168
        %v173 = vsub.f32 0.0, %v169
        %v174 = vsub.f32 0.0, %v170
        %v175 = vsub.f32 0.0, %v171
        %v176 = vmul.f32 %v172, 1.442695
        %v177 = vpow.pop %v176
        %v178 = vmul.f32 %v173, 1.442695
        %v179 = vpow.pop %v178
        %v180 = vmul.f32 %v174, 1.442695
        %v181 = vpow.pop %v180
        %v182 = vmul.f32 %v175, 1.442695
        %v183 = vpow.pop %v182
        %v184 = vadd.f32 %v177, 1.0
        %v185 = vlog2.pop %v184
        %v186 = vmul.f32 %v185, 0.6931472
        %v187 = vmul.f32 -0.5, %v177
        %v188 = vadd.f32 %v187, 1.0
        %v189 = vmul.f32 %v188, %v177
        %v190 = vand.u32 2147483647, %v177
        %vm191 = vcmp.lt.f32.partialorder %v190, 0.0004427343
        %v192 = vsel %vm191, %v189, %v186
        %v193 = vadd.f32 %v179, 1.0
        %v194 = vlog2.pop %v193
        %v195 = vmul.f32 %v194, 0.6931472
        %v196 = vmul.f32 -0.5, %v179
        %v197 = vadd.f32 %v196, 1.0
        %v198 = vmul.f32 %v197, %v179
        %v199 = vand.u32 2147483647, %v179
        %vm200 = vcmp.lt.f32.partialorder %v199, 0.0004427343
        %v201 = vsel %vm200, %v198, %v195
        %v202 = vadd.f32 %v181, 1.0
        %v203 = vlog2.pop %v202
        %v204 = vmul.f32 %v203, 0.6931472
        %v205 = vmul.f32 -0.5, %v181
        %v206 = vadd.f32 %v205, 1.0
        %v207 = vmul.f32 %v206, %v181
        %v208 = vand.u32 2147483647, %v181
        %vm209 = vcmp.lt.f32.partialorder %v208, 0.0004427343
        %v210 = vsel %vm209, %v207, %v204
        %v211 = vadd.f32 %v183, 1.0
        %v212 = vlog2.pop %v211
        %v213 = vmul.f32 %v212, 0.6931472
        %v214 = vmul.f32 -0.5, %v183
        %v215 = vadd.f32 %v214, 1.0
        %v216 = vmul.f32 %v215, %v183
        %v217 = vand.u32 2147483647, %v183
        %vm218 = vcmp.lt.f32.partialorder %v217, 0.0004427343
        %v219 = vsel %vm218, %v216, %v213
        %v220 = vadd.f32 %v164, %v192
        %v221 = vadd.f32 %v165, %v201
        %v222 = vadd.f32 %v166, %v210
        %v223 = vadd.f32 %v167, %v219
        %v224 = vadd.f32 %v220, %v221
        %v225 = vadd.f32 %v224, %v222
        %v226 = vadd.f32 %v225, %v223
        %v227 = vadd.f32 %v226, 0.0
        %v228 = vld [vmem:[%s150] sm:$0xff]
        %v229 = vadd.f32 %v228, %v227
        %230 = vst [vmem:[%s150] sm:$0xff] %v229
        %s231 = sand.u32 %s66, 1
        %s232 = scalar_lea.sflag [#allocation4], %s231
        %s233 = sand.u32 %s66, 1
        %s234 = smul.addr %s233, 8
        %s235 = scalar_lea.vmem [#allocation5], %s234
        // Predicated region
        $region33: #{tpu_custom_call.1} parent=23 // pred_check
          %p236 = pneg %p76
        $region34: #{tpu_custom_call.1} parent=23 // pred_check_branch
          %238 = sbr.rel (%p236) target = $region36
        $region35: #{tpu_custom_call.1} parent=23 // pred_region
          %240 = vsyncadd %s232, 0
          %s241 = smul.addr %s22, 8
          %s242 = scalar_lea.hbm %s1, %s241
          %s244 = sshll.u32 %s235, 4
          %s245 = int_to_ptr.vmem [resolvable:$true] %s244
          %s246 = sshll.u32 %s242, 4
          %s247 = int_to_ptr.hbm [resolvable:$true] %s246
          %249 = dma.vmem_to_hbm [thread:$0]  %s245, 128, %s247, %s232
        $region36: #{tpu_custom_call.1} parent=23 // pred_fallthru
          _
      $region24: #{tpu_custom_call.1} parent=5 // pred_fallthru
        _
      %p250 = scmp.le.s32.totalorder 2, %s13
      // Predicated region
      $region37: #{tpu_custom_call.1} parent=5 // pred_check
        %p251 = pneg %p250
      $region38: #{tpu_custom_call.1} parent=5 // pred_check_branch
        %253 = sbr.rel (%p251) target = $region40
      $region39: #{tpu_custom_call.1} parent=5 // pred_region
        %s254 = ssub.s32 %s13, 2
        // Predicated region
        $region41: #{tpu_custom_call.1} parent=39 // pred_check
          %p255 = pneg %p82
        $region42: #{tpu_custom_call.1} parent=39 // pred_check_branch
          %257 = sbr.rel (%p255) target = $region44
        $region43: #{tpu_custom_call.1} parent=39 // pred_region
          %s258 = sand.u32 %s67, 1
          %s259 = scalar_lea.sflag [#allocation4], %s258
          %s260 = sand.u32 %s67, 1
          %s261 = smul.addr %s260, 8
          %s262 = scalar_lea.vmem [#allocation5], %s261
          %264 = dma.done %s259, 128
        $region44: #{tpu_custom_call.1} parent=39 // pred_fallthru
          _
      $region40: #{tpu_custom_call.1} parent=5 // pred_fallthru
        _
    $region6: #{tpu_custom_call.1} parent=1 // loop_footer
      %s17 = sadd.s32 1, %s13
    $region7: #{tpu_custom_call.1} parent=1 // loop_footer_branch
      %12 = sbr.rel target = $region3
    $region8: #{tpu_custom_call.1} parent=1 // loop_exit
      _
    %265 = vsyncpa [#allocation3], 1
    %s266 = scalar_lea.sflag [#allocation3], 1
    %267 = vsyncpa %s266, 1
    %268 = vsyncpa [#allocation4], 1
    %s269 = scalar_lea.sflag [#allocation4], 1
    %270 = vsyncpa %s269, 1

</llo_original>
